<compile_context>
chip_gen: v7x
topology: tpu7x:2x2x1
jax: 0.10.0
libtpu: 0.0.40
codegen_flags: <defaults>
</compile_context>

<pallas_src>
import jax
import jax.numpy as jnp
from jax.experimental import pallas as pl
from jax.experimental.pallas import tpu as pltpu

PHENOTYPE_EMBEDDING_SIZE = 10
GENE_EMBEDDING_SIZE = 10
PROTEIN_EMBEDDING_SIZE = 10
TOTAL_EMBEDDING_SIZE = (
    PHENOTYPE_EMBEDDING_SIZE + GENE_EMBEDDING_SIZE + PROTEIN_EMBEDDING_SIZE
)  # 30
FINAL_EMBEDDING_SIZE = 15
NUM_CLASSES = 27

DEFAULT_BLOCK_B = 4096  # rows per grid step (multiple of 8)


def _round_up(x, m):
    return ((x + m - 1) // m) * m


def predictor_kernel(x_ref, w_enc_ref, b_enc_ref, w1_ref, b1_ref, w2_ref, b2_ref,
                     out_ref):
    # Fused encoder: one (tb, 48) @ (48, 30) bf16 matmul against a
    # block-diagonal weight == concat(ph_enc, ge_enc, pr_enc).  f32 accumulate.
    enc = (
        jnp.dot(x_ref[...].astype(jnp.bfloat16), w_enc_ref[...],
                preferred_element_type=jnp.float32)
        + b_enc_ref[...]
    )
    a = jnp.maximum(enc, 0.0)

    # fc1
    h = (
        jnp.dot(a.astype(jnp.bfloat16), w1_ref[...],
                preferred_element_type=jnp.float32)
        + b1_ref[...]
    )
    h = jnp.maximum(h, 0.0)

    # fc2 + softmax over classes (exact division so rows sum to 1).
    logits = (
        jnp.dot(h.astype(jnp.bfloat16), w2_ref[...],
                preferred_element_type=jnp.float32)
        + b2_ref[...]
    )
    m = jnp.max(logits, axis=-1, keepdims=True)
    e = jnp.exp(logits - m)
    denom = jnp.sum(e, axis=-1, keepdims=True)
    out_ref[...] = e / denom


def predictor_forward(phenotypes, genes, proteins, params, block_b=DEFAULT_BLOCK_B):
    B = phenotypes.shape[0]
    n_ph, n_ge, n_pr = phenotypes.shape[1], genes.shape[1], proteins.shape[1]
    n_in = n_ph + n_ge + n_pr

    # --- fused block-diagonal encoder weight (n_in, 30), bf16; fused bias f32.
    w_enc = jnp.zeros((n_in, TOTAL_EMBEDDING_SIZE), jnp.float32)
    w_enc = w_enc.at[:n_ph, :PHENOTYPE_EMBEDDING_SIZE].set(params["w_ph"])
    w_enc = w_enc.at[
        n_ph:n_ph + n_ge,
        PHENOTYPE_EMBEDDING_SIZE:PHENOTYPE_EMBEDDING_SIZE + GENE_EMBEDDING_SIZE,
    ].set(params["w_ge"])
    w_enc = w_enc.at[
        n_ph + n_ge:,
        PHENOTYPE_EMBEDDING_SIZE + GENE_EMBEDDING_SIZE:,
    ].set(params["w_pr"])
    w_enc = w_enc.astype(jnp.bfloat16)
    b_enc = jnp.concatenate([params["b_ph"], params["b_ge"], params["b_pr"]], axis=1)
    w1 = params["w1"].astype(jnp.bfloat16)
    w2 = params["w2"].astype(jnp.bfloat16)

    # TODO(synk): have the producer emit a pre-concatenated (B, n_in) array so
    # this concat does not add an extra HBM pass over the inputs.
    x = jnp.concatenate([phenotypes, genes, proteins], axis=1)

    # Row tile: multiple of 8 sublanes, >= 2 grid steps for large B (megacore),
    # no batch padding: grid = cdiv(B, tb) and the OOB tail block is masked.
    tb = max(8, min(block_b, _round_up(pl.cdiv(B, 2), 8), _round_up(B, 8)))
    grid = (pl.cdiv(B, tb),)

    cost = pl.CostEstimate(
        flops=2 * B * (n_in * TOTAL_EMBEDDING_SIZE
                       + TOTAL_EMBEDDING_SIZE * FINAL_EMBEDDING_SIZE
                       + FINAL_EMBEDDING_SIZE * NUM_CLASSES),
        transcendentals=B * NUM_CLASSES,
        bytes_accessed=(4 * B * (n_in + NUM_CLASSES)
                        + 2 * (n_in * TOTAL_EMBEDDING_SIZE
                               + TOTAL_EMBEDDING_SIZE * FINAL_EMBEDDING_SIZE
                               + FINAL_EMBEDDING_SIZE * NUM_CLASSES)),
    )

    const_spec = lambda shape: pl.BlockSpec(shape, lambda i: (0, 0))

    out = pl.pallas_call(
        predictor_kernel,
        out_shape=jax.ShapeDtypeStruct((B, NUM_CLASSES), jnp.float32),
        grid=grid,
        in_specs=[
            pl.BlockSpec((tb, n_in), lambda i: (i, 0)),                   # x (fused inputs)
            const_spec((n_in, TOTAL_EMBEDDING_SIZE)),                     # w_enc (bf16)
            const_spec((1, TOTAL_EMBEDDING_SIZE)),                        # b_enc
            const_spec((TOTAL_EMBEDDING_SIZE, FINAL_EMBEDDING_SIZE)),     # w1 (bf16)
            const_spec((1, FINAL_EMBEDDING_SIZE)),                        # b1
            const_spec((FINAL_EMBEDDING_SIZE, NUM_CLASSES)),              # w2 (bf16)
            const_spec((1, NUM_CLASSES)),                                 # b2
        ],
        out_specs=pl.BlockSpec((tb, NUM_CLASSES), lambda i: (i, 0)),
        compiler_params=pltpu.CompilerParams(
            dimension_semantics=("parallel",),
            vmem_limit_bytes=48 * 1024 * 1024,
        ),
        cost_estimate=cost,
    )(x, w_enc, b_enc, w1, params["b1"], w2, params["b2"])
    return out


def init_params(key, nb_phenotypes, nb_genes, nb_proteins):
    """Deterministic init. Weights stored as (in_features, out_features), f32."""
    ks = jax.random.split(key, 10)

    def linear(kw, kb, fan_in, fan_out):
        bound = 1.0 / jnp.sqrt(jnp.float32(fan_in))
        w = jax.random.uniform(kw, (fan_in, fan_out), jnp.float32, -bound, bound)
        b = jax.random.uniform(kb, (1, fan_out), jnp.float32, -bound, bound)
        return w, b

    w_ph, b_ph = linear(ks[0], ks[1], nb_phenotypes, PHENOTYPE_EMBEDDING_SIZE)
    w_ge, b_ge = linear(ks[2], ks[3], nb_genes, GENE_EMBEDDING_SIZE)
    w_pr, b_pr = linear(ks[4], ks[5], nb_proteins, PROTEIN_EMBEDDING_SIZE)
    w1, b1 = linear(ks[6], ks[7], TOTAL_EMBEDDING_SIZE, FINAL_EMBEDDING_SIZE)
    w2, b2 = linear(ks[8], ks[9], FINAL_EMBEDDING_SIZE, NUM_CLASSES)
    return dict(w_ph=w_ph, b_ph=b_ph, w_ge=w_ge, b_ge=b_ge,
                w_pr=w_pr, b_pr=b_pr, w1=w1, b1=b1, w2=w2, b2=b2)


def predictor_reference(phenotypes, genes, proteins, p):
    """Pure-JAX f32 reference mirroring the torch forward exactly."""
    ph = phenotypes @ p["w_ph"] + p["b_ph"]
    ge = genes @ p["w_ge"] + p["b_ge"]
    pr = proteins @ p["w_pr"] + p["b_pr"]
    enc = jnp.concatenate([ph, ge, pr], axis=1)
    h = jax.nn.relu(enc)
    h = jax.nn.relu(h @ p["w1"] + p["b1"])
    logits = h @ p["w2"] + p["b2"]
    return jax.nn.softmax(logits, axis=-1)


def predictor_reference_bf16(phenotypes, genes, proteins, p):
    """Reference matching the kernel's bf16-operand / f32-accumulate matmuls."""
    def mm(a, w):
        return jnp.dot(a.astype(jnp.bfloat16), w.astype(jnp.bfloat16),
                       preferred_element_type=jnp.float32)
    ph = mm(phenotypes, p["w_ph"]) + p["b_ph"]
    ge = mm(genes, p["w_ge"]) + p["b_ge"]
    pr = mm(proteins, p["w_pr"]) + p["b_pr"]
    enc = jnp.concatenate([ph, ge, pr], axis=1)
    h = jax.nn.relu(enc)
    h = jax.nn.relu(mm(h, p["w1"]) + p["b1"])
    logits = mm(h, p["w2"]) + p["b2"]
    return jax.nn.softmax(logits, axis=-1)


if __name__ == "__main__":
    nb_phenotypes, nb_genes, nb_proteins = 16, 16, 16

    key = jax.random.PRNGKey(0)
    k_in, k_params, k_in2 = jax.random.split(key, 3)
    params = init_params(k_params, nb_phenotypes, nb_genes, nb_proteins)

    # --- small primary test (single grid block) ---
    B = 8
    k_ph, k_ge, k_pr = jax.random.split(k_in, 3)
    phenotypes = jax.random.normal(k_ph, (B, nb_phenotypes), jnp.float32)
    genes = jax.random.normal(k_ge, (B, nb_genes), jnp.float32)
    proteins = jax.random.normal(k_pr, (B, nb_proteins), jnp.float32)

    out = predictor_forward(phenotypes, genes, proteins, params)
    out = jax.block_until_ready(out)
    ref32 = predictor_reference(phenotypes, genes, proteins, params)
    ref16 = predictor_reference_bf16(phenotypes, genes, proteins, params)
    assert out.shape == (B, NUM_CLASSES)
    # implementation check vs bf16-matched reference (tight)
    assert jnp.allclose(out, ref16, atol=2e-3, rtol=2e-3), "mismatch vs bf16 reference (B=8)"
    # precision check vs pure-f32 reference (bf16-matmul quantization error)
    assert jnp.allclose(out, ref32, atol=2e-2, rtol=2e-2), "mismatch vs f32 reference (B=8)"
    # exact-division softmax: rows sum to 1 within f32 rounding
    assert jnp.allclose(jnp.sum(out, axis=-1), 1.0, atol=1e-4)

    # --- secondary test exercising the batch grid + masked (unpadded) tail block ---
    B2 = 200
    k_ph2, k_ge2, k_pr2 = jax.random.split(k_in2, 3)
    ph2 = jax.random.normal(k_ph2, (B2, nb_phenotypes), jnp.float32)
    ge2 = jax.random.normal(k_ge2, (B2, nb_genes), jnp.float32)
    pr2 = jax.random.normal(k_pr2, (B2, nb_proteins), jnp.float32)

    out2 = predictor_forward(ph2, ge2, pr2, params, block_b=64)  # grid of 4, ragged tail
    out2 = jax.block_until_ready(out2)
    ref32_2 = predictor_reference(ph2, ge2, pr2, params)
    ref16_2 = predictor_reference_bf16(ph2, ge2, pr2, params)
    assert out2.shape == (B2, NUM_CLASSES)
    assert jnp.allclose(out2, ref16_2, atol=2e-3, rtol=2e-3), "mismatch vs bf16 reference (B=200)"
    assert jnp.allclose(out2, ref32_2, atol=2e-2, rtol=2e-2), "mismatch vs f32 reference (B=200)"
    assert jnp.allclose(jnp.sum(out2, axis=-1), 1.0, atol=1e-4)

    print("KERNEL_OK")
</pallas_src>

<mosaic_0001>
module attributes {stable_mosaic.version = 11 : i64} {
  func.func @predictor_kernel(%arg0: i32, %arg1: memref<8x48xf32, #tpu.memory_space<vmem>>, %arg2: memref<48x30xbf16, #tpu.memory_space<vmem>>, %arg3: memref<1x30xf32, #tpu.memory_space<vmem>>, %arg4: memref<30x15xbf16, #tpu.memory_space<vmem>>, %arg5: memref<1x15xf32, #tpu.memory_space<vmem>>, %arg6: memref<15x27xbf16, #tpu.memory_space<vmem>>, %arg7: memref<1x27xf32, #tpu.memory_space<vmem>>, %arg8: memref<8x27xf32, #tpu.memory_space<vmem>>) attributes {dimension_semantics = [#tpu.dimension_semantics<parallel>], iteration_bounds = array<i64: 1>, scalar_prefetch = 0 : i64, scratch_operands = 0 : i64, tpu.core_type = #tpu.core_type<tc>, window_params = [{transform_indices = @transform_0, window_bounds = array<i64: 8, 48>}, {pipeline_mode = #tpu.pipeline_mode<synchronous>, transform_indices = @transform_1, window_bounds = array<i64: 48, 30>}, {pipeline_mode = #tpu.pipeline_mode<synchronous>, transform_indices = @transform_2, window_bounds = array<i64: 1, 30>}, {pipeline_mode = #tpu.pipeline_mode<synchronous>, transform_indices = @transform_3, window_bounds = array<i64: 30, 15>}, {pipeline_mode = #tpu.pipeline_mode<synchronous>, transform_indices = @transform_4, window_bounds = array<i64: 1, 15>}, {pipeline_mode = #tpu.pipeline_mode<synchronous>, transform_indices = @transform_5, window_bounds = array<i64: 15, 27>}, {pipeline_mode = #tpu.pipeline_mode<synchronous>, transform_indices = @transform_6, window_bounds = array<i64: 1, 27>}, {transform_indices = @transform_7, window_bounds = array<i64: 8, 27>}]} {
    %c0 = arith.constant 0 : index
    %c0_0 = arith.constant 0 : index
    %0 = vector.load %arg1[%c0, %c0_0] : memref<8x48xf32, #tpu.memory_space<vmem>>, vector<8x48xf32>
    %1 = arith.truncf %0 : vector<8x48xf32> to vector<8x48xbf16>
    %c0_1 = arith.constant 0 : index
    %c0_2 = arith.constant 0 : index
    %2 = vector.load %arg2[%c0_1, %c0_2] : memref<48x30xbf16, #tpu.memory_space<vmem>>, vector<48x30xbf16>
    %cst = arith.constant dense<0.000000e+00> : vector<8x30xf32>
    %3 = tpu.matmul %1, %2, %cst {dimension_numbers = #tpu.dot_dimension_numbers<[1], [0], [0], [1], [0, 0, 1, 1], [], []>} : vector<8x48xbf16>, vector<48x30xbf16>, vector<8x30xf32> -> vector<8x30xf32>
    %c0_3 = arith.constant 0 : index
    %c0_4 = arith.constant 0 : index
    %4 = vector.load %arg3[%c0_3, %c0_4] : memref<1x30xf32, #tpu.memory_space<vmem>>, vector<1x30xf32>
    %5 = vector.broadcast %4 : vector<1x30xf32> to vector<8x30xf32>
    %6 = arith.addf %3, %5 : vector<8x30xf32>
    %cst_5 = arith.constant 0.000000e+00 : f32
    %7 = vector.broadcast %cst_5 : f32 to vector<8x30xf32>
    %8 = arith.maximumf %6, %7 : vector<8x30xf32>
    %9 = arith.truncf %8 : vector<8x30xf32> to vector<8x30xbf16>
    %c0_6 = arith.constant 0 : index
    %c0_7 = arith.constant 0 : index
    %10 = vector.load %arg4[%c0_6, %c0_7] : memref<30x15xbf16, #tpu.memory_space<vmem>>, vector<30x15xbf16>
    %cst_8 = arith.constant dense<0.000000e+00> : vector<8x15xf32>
    %11 = tpu.matmul %9, %10, %cst_8 {dimension_numbers = #tpu.dot_dimension_numbers<[1], [0], [0], [1], [0, 0, 1, 1], [], []>} : vector<8x30xbf16>, vector<30x15xbf16>, vector<8x15xf32> -> vector<8x15xf32>
    %c0_9 = arith.constant 0 : index
    %c0_10 = arith.constant 0 : index
    %12 = vector.load %arg5[%c0_9, %c0_10] : memref<1x15xf32, #tpu.memory_space<vmem>>, vector<1x15xf32>
    %13 = vector.broadcast %12 : vector<1x15xf32> to vector<8x15xf32>
    %14 = arith.addf %11, %13 : vector<8x15xf32>
    %cst_11 = arith.constant 0.000000e+00 : f32
    %15 = vector.broadcast %cst_11 : f32 to vector<8x15xf32>
    %16 = arith.maximumf %14, %15 : vector<8x15xf32>
    %17 = arith.truncf %16 : vector<8x15xf32> to vector<8x15xbf16>
    %c0_12 = arith.constant 0 : index
    %c0_13 = arith.constant 0 : index
    %18 = vector.load %arg6[%c0_12, %c0_13] : memref<15x27xbf16, #tpu.memory_space<vmem>>, vector<15x27xbf16>
    %cst_14 = arith.constant dense<0.000000e+00> : vector<8x27xf32>
    %19 = tpu.matmul %17, %18, %cst_14 {dimension_numbers = #tpu.dot_dimension_numbers<[1], [0], [0], [1], [0, 0, 1, 1], [], []>} : vector<8x15xbf16>, vector<15x27xbf16>, vector<8x27xf32> -> vector<8x27xf32>
    %c0_15 = arith.constant 0 : index
    %c0_16 = arith.constant 0 : index
    %20 = vector.load %arg7[%c0_15, %c0_16] : memref<1x27xf32, #tpu.memory_space<vmem>>, vector<1x27xf32>
    %21 = vector.broadcast %20 : vector<1x27xf32> to vector<8x27xf32>
    %22 = arith.addf %19, %21 : vector<8x27xf32>
    %cst_17 = arith.constant dense<0xFF800000> : vector<8xf32>
    %23 = vector.multi_reduction <maximumf>, %22, %cst_17 [1] : vector<8x27xf32> to vector<8xf32>
    %24 = vector.shape_cast %23 : vector<8xf32> to vector<8x1xf32>
    %25 = vector.broadcast %24 : vector<8x1xf32> to vector<8x27xf32>
    %26 = arith.subf %22, %25 : vector<8x27xf32>
    %27 = math.exp %26 : vector<8x27xf32>
    %cst_18 = arith.constant dense<0.000000e+00> : vector<8xf32>
    %28 = vector.multi_reduction <add>, %27, %cst_18 [1] : vector<8x27xf32> to vector<8xf32>
    %29 = vector.shape_cast %28 : vector<8xf32> to vector<8x1xf32>
    %30 = vector.broadcast %29 : vector<8x1xf32> to vector<8x27xf32>
    %31 = arith.divf %27, %30 : vector<8x27xf32>
    %c0_19 = arith.constant 0 : index
    %c0_20 = arith.constant 0 : index
    %32 = vector.load %arg8[%c0_19, %c0_20] : memref<8x27xf32, #tpu.memory_space<vmem>>, vector<8x27xf32>
    tpu.vector_store %arg8[%c0_19, %c0_20], %31 {strides = array<i32>} : memref<8x27xf32, #tpu.memory_space<vmem>>, vector<8x27xf32>,
    return
  }
  func.func @transform_0(%arg0: i32) -> (i32, i32) {
    %c0_i32 = arith.constant 0 : i32
    %c0_i32_0 = arith.constant 0 : i32
    return %arg0, %c0_i32 : i32, i32
  }
  func.func @transform_1(%arg0: i32) -> (i32, i32) {
    %c0_i32 = arith.constant 0 : i32
    %c0_i32_0 = arith.constant 0 : i32
    %c0_i32_1 = arith.constant 0 : i32
    return %c0_i32, %c0_i32_0 : i32, i32
  }
  func.func @transform_2(%arg0: i32) -> (i32, i32) {
    %c0_i32 = arith.constant 0 : i32
    %c0_i32_0 = arith.constant 0 : i32
    %c0_i32_1 = arith.constant 0 : i32
    return %c0_i32, %c0_i32_0 : i32, i32
  }
  func.func @transform_3(%arg0: i32) -> (i32, i32) {
    %c0_i32 = arith.constant 0 : i32
    %c0_i32_0 = arith.constant 0 : i32
    %c0_i32_1 = arith.constant 0 : i32
    return %c0_i32, %c0_i32_0 : i32, i32
  }
  func.func @transform_4(%arg0: i32) -> (i32, i32) {
    %c0_i32 = arith.constant 0 : i32
    %c0_i32_0 = arith.constant 0 : i32
    %c0_i32_1 = arith.constant 0 : i32
    return %c0_i32, %c0_i32_0 : i32, i32
  }
  func.func @transform_5(%arg0: i32) -> (i32, i32) {
    %c0_i32 = arith.constant 0 : i32
    %c0_i32_0 = arith.constant 0 : i32
    %c0_i32_1 = arith.constant 0 : i32
    return %c0_i32, %c0_i32_0 : i32, i32
  }
  func.func @transform_6(%arg0: i32) -> (i32, i32) {
    %c0_i32 = arith.constant 0 : i32
    %c0_i32_0 = arith.constant 0 : i32
    %c0_i32_1 = arith.constant 0 : i32
    return %c0_i32, %c0_i32_0 : i32, i32
  }
  func.func @transform_7(%arg0: i32) -> (i32, i32) {
    %c0_i32 = arith.constant 0 : i32
    %c0_i32_0 = arith.constant 0 : i32
    return %arg0, %c0_i32 : i32, i32
  }
}

</mosaic_0001>

<llo_original>
// kernel: tpu_custom_call.1
$region0: #{tpu_custom_call.1}
  #allocation0 [shape = 'u32[]', space=smem, size = 0x4, offset = 0x4, fixed_abs, tag = 'smem constant byte address 0x4 - core index']
  #allocation1 [shape = 'u32[144,128]{1,0:T(1,128)}', space=vmem, size = 0x12000, scoped, tag = 'internal scratch']
  %s0 = inlined_call_operand.vmem [shape: f32[8,48], index: 0, kind: input, shape index: {}]
  %s1 = inlined_call_operand.vmem [shape: bf16[48,30], index: 1, kind: input, shape index: {}]
  %s2 = inlined_call_operand.vmem [shape: f32[1,30], index: 2, kind: input, shape index: {}]
  %s3 = inlined_call_operand.vmem [shape: bf16[30,15], index: 3, kind: input, shape index: {}]
  %s4 = inlined_call_operand.vmem [shape: f32[1,15], index: 4, kind: input, shape index: {}]
  %s5 = inlined_call_operand.vmem [shape: bf16[15,27], index: 5, kind: input, shape index: {}]
  %s6 = inlined_call_operand.vmem [shape: f32[1,27], index: 6, kind: input, shape index: {}]
  %s7 = inlined_call_operand.hbm [shape: f32[8,27], index: 7, kind: output, shape index: {}]
  %s8 = sld [smem:[#allocation0]]
  $region38: #{tpu_custom_call.1} parent=0
    _
  %s10 = ssub.s32 1, %s8
  %s11 = scalar_select 0, %s10, %s8
  $region1: #{tpu_custom_call.1} parent=0
    #allocation2 [shape = 'u8[4096]{0}', space=vmem, size = 0x1000, scoped, tag = 'output window, operand 0, single buffered']
    #allocation3 [shape = 's32[1]{0}', space=sflag, size = 0x4, scoped, tag = 'scoped memory for tpu_custom_call.1']
    %12 = vsyncpa [#allocation3], 0
    // Predicated region
    $region2: #{tpu_custom_call.1} parent=1 // pred_check
      _
    $region3: #{tpu_custom_call.1} parent=1 // pred_check_branch
      %14 = sbr.rel (0) target = $region5
    $region4: #{tpu_custom_call.1} parent=1 // pred_region
      _
    $region5: #{tpu_custom_call.1} parent=1 // pred_fallthru
      _
    // Predicated region
    $region6: #{tpu_custom_call.1} parent=1 // pred_check
      _
    $region7: #{tpu_custom_call.1} parent=1 // pred_check_branch
      %16 = sbr.rel (0) target = $region9
    $region8: #{tpu_custom_call.1} parent=1 // pred_region
      _
    $region9: #{tpu_custom_call.1} parent=1 // pred_fallthru
      _
    // Predicated region
    $region10: #{tpu_custom_call.1} parent=1 // pred_check
      _
    $region11: #{tpu_custom_call.1} parent=1 // pred_check_branch
      %18 = sbr.rel (0) target = $region13
    $region12: #{tpu_custom_call.1} parent=1 // pred_region
      _
    $region13: #{tpu_custom_call.1} parent=1 // pred_fallthru
      _
    // Predicated region
    $region14: #{tpu_custom_call.1} parent=1 // pred_check
      _
    $region15: #{tpu_custom_call.1} parent=1 // pred_check_branch
      %20 = sbr.rel (0) target = $region17
    $region16: #{tpu_custom_call.1} parent=1 // pred_region
      _
    $region17: #{tpu_custom_call.1} parent=1 // pred_fallthru
      _
    // Predicated region
    $region18: #{tpu_custom_call.1} parent=1 // pred_check
      _
    $region19: #{tpu_custom_call.1} parent=1 // pred_check_branch
      %22 = sbr.rel (0) target = $region21
    $region20: #{tpu_custom_call.1} parent=1 // pred_region
      _
    $region21: #{tpu_custom_call.1} parent=1 // pred_fallthru
      _
    // Predicated region
    $region22: #{tpu_custom_call.1} parent=1 // pred_check
      _
    $region23: #{tpu_custom_call.1} parent=1 // pred_check_branch
      %24 = sbr.rel (0) target = $region25
    $region24: #{tpu_custom_call.1} parent=1 // pred_region
      _
    $region25: #{tpu_custom_call.1} parent=1 // pred_fallthru
      _
    // Predicated region
    $region26: #{tpu_custom_call.1} parent=1 // pred_check
      _
    $region27: #{tpu_custom_call.1} parent=1 // pred_check_branch
      %26 = sbr.rel (0) target = $region29
    $region28: #{tpu_custom_call.1} parent=1 // pred_region
      _
    $region29: #{tpu_custom_call.1} parent=1 // pred_fallthru
      _
    %v28 = vld [vmem:[%s0] sm:$0xff]
    %v29 = vpack.c.bf16 %v28, %v28
    %v30 = vld [vmem:[%s1] sm:$0xf]
    %v31 = vld [vmem:[%s1 + $0x4] sm:$0xf]
    %v32 = vld [vmem:[%s1 + $0x8] sm:$0xf]
    %v33 = vld [vmem:[%s1 + $0xc] sm:$0xf]
    %v34 = vld [vmem:[%s1 + $0x10] sm:$0xf]
    %v35 = vld [vmem:[%s1 + $0x14] sm:$0xf]
    %v36 = vld [vmem:[%s2] sm:$0x1]
    %v38 = vlaneseq
    %v39 = vshrl.u32 %v38, 7
    %v40 = vsub.s32 0, %v39
    %v41 = vrot.slane %v36, %v40
    %v49 = vunpack.c.l.b16 %v30
    %v50 = vunpack.c.l.b16 %v31
    %v51 = vunpack.c.l.b16 %v32
    %v52 = vunpack.c.l.b16 %v33
    %v53 = vunpack.c.l.b16 %v34
    %v54 = vunpack.c.l.b16 %v35
    %v55 = vpack.c.b16 %v50, %v49
    %v56 = vpack.c.b16 %v52, %v51
    %v57 = vpack.c.b16 %v54, %v53
    %vm61 = vcmask 392192
    %v63 = vsel %vm61, %v29, 0
    %65 = vmatprep.subr.bf16.mxu0 0
    %66 = vmatpush1.bf16.msra.mxu0 %v55
    %67 = vmatprep.subr.bf16.mxu0 0
    %68 = vmatpush1.bf16.msra.mxu0 %v56
    %69 = vmatprep.subr.bf16.mxu0 0
    %70 = vmatpush1.bf16.msra.mxu0 %v57
    %71 = vmatprep.subr.bf16.mxu0 0
    %72 = vmatpush1.bf16.msra.mxu0 0
    %73 = vmatprep.subr.bf16.mxu0 0
    %74 = vmatpush1.bf16.msra.mxu0 0
    %75 = vmatprep.subr.bf16.mxu0 0
    %76 = vmatpush1.bf16.msra.mxu0 0
    %77 = vmatprep.subr.bf16.mxu0 0
    %78 = vmatpush1.bf16.msra.mxu0 0
    %79 = vmatprep.subr.bf16.mxu0 0
    %80 = vmatpush1.bf16.msra.mxu0 0
    %81 = vmatprep.subr.bf16.mxu0 0
    %82 = vmatpush1.bf16.msra.mxu0 0
    %83 = vmatprep.subr.bf16.mxu0 0
    %84 = vmatpush1.bf16.msra.mxu0 0
    %85 = vmatprep.subr.bf16.mxu0 0
    %86 = vmatpush1.bf16.msra.mxu0 0
    %87 = vmatprep.subr.bf16.mxu0 0
    %88 = vmatpush1.bf16.msra.mxu0 0
    %89 = vmatprep.subr.bf16.mxu0 0
    %90 = vmatpush1.bf16.msra.mxu0 0
    %91 = vmatprep.subr.bf16.mxu0 0
    %92 = vmatpush1.bf16.msra.mxu0 0
    %93 = vmatprep.subr.bf16.mxu0 0
    %94 = vmatpush1.bf16.msra.mxu0 0
    %95 = vmatprep.subr.bf16.mxu0 0
    %96 = vmatpush1.bf16.msra.mxu0 0
    %97 = vmatprep.mubr.bf16.mxu0 0
    %98 = vmatmul.mubr.bf16.gmra.mrb[0].mxu0 %v63
    %v99 = vpop.f32.mrb[0].mxu0
    %v100 = vadd.f32 %v41, %v99
    %v101 = vpop.f32.mrb[0].mxu0
    %v102 = vpop.f32.mrb[0].mxu0
    %v103 = vpop.f32.mrb[0].mxu0
    %104 = vdwg.mxu0
    %v105 = vmax.f32 %v100, 0.0
    %v106 = vpack.c.bf16 %v105, %v105
    %v107 = vld [vmem:[%s3] sm:$0xf]
    %v108 = vld [vmem:[%s3 + $0x4] sm:$0xf]
    %v109 = vld [vmem:[%s3 + $0x8] sm:$0xf]
    %v110 = vld [vmem:[%s3 + $0xc] sm:$0x7]
    %v111 = vld [vmem:[%s4] sm:$0x1]
    %v113 = vlaneseq
    %v114 = vshrl.u32 %v113, 7
    %v115 = vsub.s32 0, %v114
    %v116 = vrot.slane %v111, %v115
    %v122 = vunpack.c.l.b16 %v107
    %v123 = vunpack.c.l.b16 %v108
    %v124 = vunpack.c.l.b16 %v109
    %v125 = vunpack.c.l.b16 %v110
    %v126 = vpack.c.b16 %v123, %v122
    %v127 = vpack.c.b16 %v125, %v124
    %vm129 = vcmask 244736
    %v131 = vsel %vm129, %v106, 0
    %vm133 = vcmask 1046528
    %v135 = vsel %vm133, %v127, 0
    %137 = vmatprep.subr.bf16.mxu0 0
    %138 = vmatpush1.bf16.msra.mxu0 %v126
    %139 = vmatprep.subr.bf16.mxu0 0
    %140 = vmatpush1.bf16.msra.mxu0 %v135
    %141 = vmatprep.subr.bf16.mxu0 0
    %142 = vmatpush1.bf16.msra.mxu0 0
    %143 = vmatprep.subr.bf16.mxu0 0
    %144 = vmatpush1.bf16.msra.mxu0 0
    %145 = vmatprep.subr.bf16.mxu0 0
    %146 = vmatpush1.bf16.msra.mxu0 0
    %147 = vmatprep.subr.bf16.mxu0 0
    %148 = vmatpush1.bf16.msra.mxu0 0
    %149 = vmatprep.subr.bf16.mxu0 0
    %150 = vmatpush1.bf16.msra.mxu0 0
    %151 = vmatprep.subr.bf16.mxu0 0
    %152 = vmatpush1.bf16.msra.mxu0 0
    %153 = vmatprep.subr.bf16.mxu0 0
    %154 = vmatpush1.bf16.msra.mxu0 0
    %155 = vmatprep.subr.bf16.mxu0 0
    %156 = vmatpush1.bf16.msra.mxu0 0
    %157 = vmatprep.subr.bf16.mxu0 0
    %158 = vmatpush1.bf16.msra.mxu0 0
    %159 = vmatprep.subr.bf16.mxu0 0
    %160 = vmatpush1.bf16.msra.mxu0 0
    %161 = vmatprep.subr.bf16.mxu0 0
    %162 = vmatpush1.bf16.msra.mxu0 0
    %163 = vmatprep.subr.bf16.mxu0 0
    %164 = vmatpush1.bf16.msra.mxu0 0
    %165 = vmatprep.subr.bf16.mxu0 0
    %166 = vmatpush1.bf16.msra.mxu0 0
    %167 = vmatprep.subr.bf16.mxu0 0
    %168 = vmatpush1.bf16.msra.mxu0 0
    %169 = vmatprep.mubr.bf16.mxu0 0
    %170 = vmatmul.mubr.bf16.gmra.mrb[0].mxu0 %v131
    %v171 = vpop.f32.mrb[0].mxu0
    %v172 = vadd.f32 %v116, %v171
    %v173 = vpop.f32.mrb[0].mxu0
    %v174 = vpop.f32.mrb[0].mxu0
    %v175 = vpop.f32.mrb[0].mxu0
    %176 = vdwg.mxu0
    %v177 = vmax.f32 %v172, 0.0
    %v178 = vpack.c.bf16 %v177, %v177
    %v179 = vld [vmem:[%s5] sm:$0xf]
    %v180 = vld [vmem:[%s5 + $0x4] sm:$0xf]
    %v181 = vld [vmem:[%s6] sm:$0x1]
    %v183 = vlaneseq
    %v184 = vshrl.u32 %v183, 7
    %v185 = vsub.s32 0, %v184
    %v186 = vrot.slane %v181, %v185
    %v190 = vunpack.c.l.b16 %v179
    %v191 = vunpack.c.l.b16 %v180
    %v192 = vpack.c.b16 %v191, %v190
    %vm193 = vcmask 121856
    %v195 = vsel %vm193, %v178, 0
    %vm197 = vcmask 1047552
    %v198 = vsel %vm133, 4294967295, 65535
    %v199 = vsel %vm197, %v198, 0
    %v201 = vand.u32 %v192, %v199
    %203 = vmatprep.subr.bf16.mxu0 0
    %204 = vmatpush1.bf16.msra.mxu0 %v201
    %205 = vmatprep.subr.bf16.mxu0 0
    %206 = vmatpush1.bf16.msra.mxu0 0
    %207 = vmatprep.subr.bf16.mxu0 0
    %208 = vmatpush1.bf16.msra.mxu0 0
    %209 = vmatprep.subr.bf16.mxu0 0
    %210 = vmatpush1.bf16.msra.mxu0 0
    %211 = vmatprep.subr.bf16.mxu0 0
    %212 = vmatpush1.bf16.msra.mxu0 0
    %213 = vmatprep.subr.bf16.mxu0 0
    %214 = vmatpush1.bf16.msra.mxu0 0
    %215 = vmatprep.subr.bf16.mxu0 0
    %216 = vmatpush1.bf16.msra.mxu0 0
    %217 = vmatprep.subr.bf16.mxu0 0
    %218 = vmatpush1.bf16.msra.mxu0 0
    %219 = vmatprep.subr.bf16.mxu0 0
    %220 = vmatpush1.bf16.msra.mxu0 0
    %221 = vmatprep.subr.bf16.mxu0 0
    %222 = vmatpush1.bf16.msra.mxu0 0
    %223 = vmatprep.subr.bf16.mxu0 0
    %224 = vmatpush1.bf16.msra.mxu0 0
    %225 = vmatprep.subr.bf16.mxu0 0
    %226 = vmatpush1.bf16.msra.mxu0 0
    %227 = vmatprep.subr.bf16.mxu0 0
    %228 = vmatpush1.bf16.msra.mxu0 0
    %229 = vmatprep.subr.bf16.mxu0 0
    %230 = vmatpush1.bf16.msra.mxu0 0
    %231 = vmatprep.subr.bf16.mxu0 0
    %232 = vmatpush1.bf16.msra.mxu0 0
    %233 = vmatprep.subr.bf16.mxu0 0
    %234 = vmatpush1.bf16.msra.mxu0 0
    %235 = vmatprep.mubr.bf16.mxu0 0
    %236 = vmatmul.mubr.bf16.gmra.mrb[0].mxu0 %v195
    %v237 = vpop.f32.mrb[0].mxu0
    %v238 = vadd.f32 %v186, %v237
    %v239 = vpop.f32.mrb[0].mxu0
    %v240 = vpop.f32.mrb[0].mxu0
    %v241 = vpop.f32.mrb[0].mxu0
    %242 = vdwg.mxu0
    %vm243 = vcmask 220160
    %v244 = vsel %vm243, %v238, -inf
    %245 = vmax.xlane.f32.xlu0 %v244
    %v246 = vpop.xlane.xlu0 %245
    %v247 = vsub.f32 %v238, %v246
    %v248 = vmul.f32 %v247, 1.442695
    %v249 = vpow.pop %v248
    %v250 = vsel %vm243, %v249, 0.0
    %251 = vadd.xlane.f32.xlu0 %v250
    %v252 = vpop.xlane.xlu0 %251
    %v253 = vrcp.pop %v252
    %v254 = vmul.f32 %v249, %v253
    %255 = vst.msk [vmem:[#allocation2] sm:$0xff] %vm243, %v254
    // Predicated region
    $region30: #{tpu_custom_call.1} parent=1 // pred_check
      _
    $region31: #{tpu_custom_call.1} parent=1 // pred_check_branch
      %257 = sbr.rel (0) target = $region33
    $region32: #{tpu_custom_call.1} parent=1 // pred_region
      %s259 = ssub.s32 128, 128
      %260 = vsyncadd [#allocation3], %s259
      %s262 = sshll.u32 [#allocation2], 4
      %s263 = int_to_ptr.vmem [resolvable:$true] %s262
      %265 = dma.vmem_to_hbm [thread:$0]  %s263, 128, %s7, [#allocation3]
    $region33: #{tpu_custom_call.1} parent=1 // pred_fallthru
      _
    // Predicated region
    $region34: #{tpu_custom_call.1} parent=1 // pred_check
      _
    $region35: #{tpu_custom_call.1} parent=1 // pred_check_branch
      %267 = sbr.rel (0) target = $region37
    $region36: #{tpu_custom_call.1} parent=1 // pred_region
      %268 = dma.done [#allocation3], 128
    $region37: #{tpu_custom_call.1} parent=1 // pred_fallthru
      _
    %269 = vsyncpa [#allocation3], 1

</llo_original>
